<compile_context>
chip_gen: v5e
topology: v5e:2x2
jax: 0.10.0
libtpu: 0.0.40
codegen_flags: <defaults>
</compile_context>

<pallas_src>
import functools

import jax
import jax.numpy as jnp
from jax.experimental import pallas as pl
from jax.experimental.pallas import tpu as pltpu

SMOOTH_FACTOR = 0.05
IGNORE_INDEX = 255
_LANE = 128
_MAX_S_TILE = 512            # up to 512 sublane-rows * 128 lanes = 65536 px/step


def _soft_ce_kernel(logits_ref, tgt_ref, out_ref, *, ignore_index, out_sub,
                    s_tile, rows_total, need_tail_mask):
    """One grid step: the (C, s_tile, 128) logits tile of one sample.

    Streams the class axis (per-class (s_tile, 128) f32 slices only; no
    (C, s_tile, 128) temporaries) and writes a lane-dense (out_sub, 256)
    block of partial sums: nll in lanes [0,128), smooth loss in [128,256).
    """
    c = logits_ref.shape[1]

    tgt = tgt_ref[0, 0]                               # (s_tile, 128) int32
    valid = tgt != ignore_index
    if need_tail_mask:
        # Last S tile overhangs the array: mask rows past the real extent
        # (the overhung region of the VMEM buffer contains garbage).
        row_ids = jax.lax.broadcasted_iota(jnp.int32, (s_tile, _LANE), 0)
        rows_here = rows_total - pl.program_id(1) * s_tile
        valid = jnp.logical_and(valid, row_ids < rows_here)

    # Pass 1: per-pixel max over the class axis.  Class is the leading
    # (untiled) dim, so this is pure elementwise VPU work (no XLU).
    m = logits_ref[0, 0].astype(jnp.float32)
    for cls in range(1, c):
        m = jnp.maximum(m, logits_ref[0, cls].astype(jnp.float32))

    # Pass 2: streaming sum(exp(x-m)), sum(x), and x[target] (scalar-constant
    # class compare instead of a materialized one-hot / iota).
    acc_exp = jnp.zeros((s_tile, _LANE), jnp.float32)
    acc_sum = jnp.zeros((s_tile, _LANE), jnp.float32)
    acc_tgt = jnp.zeros((s_tile, _LANE), jnp.float32)
    for cls in range(c):
        x = logits_ref[0, cls].astype(jnp.float32)
        acc_exp = acc_exp + jnp.exp(x - m)
        acc_sum = acc_sum + x
        acc_tgt = acc_tgt + jnp.where(tgt == cls, x, 0.0)

    mlse = m + jnp.log(acc_exp)                       # per-pixel logsumexp
    nll = jnp.where(valid, mlse - acc_tgt, 0.0)                    # -logp[t]
    smooth = jnp.where(valid, jnp.float32(c) * mlse - acc_sum, 0.0)

    # Fold sublane rows down to out_sub rows (pure vreg adds), then store the
    # two partial sums into one lane-dense output block.
    nll_f = nll.reshape(s_tile // out_sub, out_sub, _LANE).sum(0)
    smooth_f = smooth.reshape(s_tile // out_sub, out_sub, _LANE).sum(0)
    out_ref[0, 0, :, :_LANE] = nll_f
    out_ref[0, 0, :, _LANE:] = smooth_f


def pidnet_loss(y_pred, y_true, *, smooth_factor=SMOOTH_FACTOR,
                ignore_index=IGNORE_INDEX):
    """y_pred: (N, C, H, W) float logits (f32 or bf16); y_true: (N, H, W) ints."""
    n, c, h, w = y_pred.shape
    p = h * w

    # Pixel layout (N, C, S, 128): pixels occupy sublanes AND lanes, class is
    # the leading untiled axis.  Common path (H*W % 128 == 0) is a zero-copy
    # reshape of the NCHW logits; dtype is left as-is (bf16 stays bf16 in HBM).
    p_pad = -(-p // _LANE) * _LANE
    logits = y_pred.reshape(n, c, p)
    tgt = y_true.astype(jnp.int32).reshape(n, 1, p)
    if p_pad != p:
        # TODO(synk): rare ragged path (H*W % 128 != 0) still pads through
        # HBM; could be replaced by a prefetched pixel count + lane mask.
        logits = jnp.pad(logits, ((0, 0), (0, 0), (0, p_pad - p)))
        tgt = jnp.pad(tgt, ((0, 0), (0, 0), (0, p_pad - p)),
                      constant_values=ignore_index)
    s = p_pad // _LANE
    logits = logits.reshape(n, c, s, _LANE)
    tgt = tgt.reshape(n, 1, s, _LANE)

    # S-axis tiling: biggest tile up to 512 rows, cdiv grid + in-kernel tail
    # mask (no divisor search, no perf cliff at awkward resolutions).
    s_tile = s if s <= _MAX_S_TILE else _MAX_S_TILE
    n_s_tiles = -(-s // s_tile)
    need_tail_mask = (s % s_tile) != 0
    out_sub = 8 if s_tile % 8 == 0 else s_tile

    kernel = functools.partial(
        _soft_ce_kernel, ignore_index=ignore_index, out_sub=out_sub,
        s_tile=s_tile, rows_total=s, need_tail_mask=need_tail_mask)

    part = pl.pallas_call(
        kernel,
        out_shape=jax.ShapeDtypeStruct((n, n_s_tiles, out_sub, 2 * _LANE),
                                       jnp.float32),
        grid_spec=pltpu.PrefetchScalarGridSpec(
            num_scalar_prefetch=0,
            grid=(n, n_s_tiles),
            in_specs=[
                pl.BlockSpec((1, c, s_tile, _LANE), lambda b, i: (b, 0, i, 0)),
                pl.BlockSpec((1, 1, s_tile, _LANE), lambda b, i: (b, 0, i, 0)),
            ],
            out_specs=pl.BlockSpec((1, 1, out_sub, 2 * _LANE),
                                   lambda b, i: (b, i, 0, 0)),
        ),
        compiler_params=pltpu.CompilerParams(
            dimension_semantics=("parallel", "parallel"),
            vmem_limit_bytes=48 * 1024 * 1024),
    )(logits, tgt)

    # Final tree-reduce of the small partial-sum array in plain XLA.
    nll_sum = jnp.sum(part[..., :_LANE])
    smooth_sum = jnp.sum(part[..., _LANE:])
    denom = jnp.float32(n * h * w)     # mean over ALL pixels (incl. ignored)
    eps = jnp.float32(smooth_factor)
    return (1.0 - eps) * nll_sum / denom \
        + (eps / jnp.float32(c)) * smooth_sum / denom


def _reference_loss(y_pred, y_true, *, smooth_factor=SMOOTH_FACTOR,
                    ignore_index=IGNORE_INDEX):
    """Pure-JAX reference of SoftCrossEntropyLoss for validation."""
    n, c, h, w = y_pred.shape
    logp = jax.nn.log_softmax(y_pred.astype(jnp.float32), axis=1)
    tgt = y_true.astype(jnp.int32)
    valid = (tgt != ignore_index)
    tgt_safe = jnp.where(valid, tgt, 0)
    nll = -jnp.take_along_axis(logp, tgt_safe[:, None], axis=1)[:, 0]
    smooth = -jnp.sum(logp, axis=1)
    nll = jnp.where(valid, nll, 0.0)
    smooth = jnp.where(valid, smooth, 0.0)
    eps = smooth_factor
    return (1.0 - eps) * jnp.mean(nll) + (eps / c) * jnp.mean(smooth)


if __name__ == "__main__":
    key = jax.random.PRNGKey(0)
    k1, k2, k3 = jax.random.split(key, 3)

    # Primary small check: N=2, C=4, 16x16, ~10% ignored pixels.
    N, C, H, W = 2, 4, 16, 16
    y_pred = jax.random.normal(k1, (N, C, H, W), dtype=jnp.float32)
    y_true = jax.random.randint(k2, (N, H, W), 0, C, dtype=jnp.int32)
    ignore_mask = jax.random.bernoulli(k3, 0.1, (N, H, W))
    y_true = jnp.where(ignore_mask, IGNORE_INDEX, y_true)

    loss = jax.block_until_ready(pidnet_loss(y_pred, y_true))
    ref = _reference_loss(y_pred, y_true)
    assert jnp.isfinite(loss), "non-finite loss"
    assert jnp.abs(loss - ref) < 1e-4, (loss, ref)

    # bf16-logits path (per-slice cast to f32 happens inside the kernel).
    loss_bf16 = jax.block_until_ready(
        pidnet_loss(y_pred.astype(jnp.bfloat16), y_true))
    ref_bf16 = _reference_loss(y_pred.astype(jnp.bfloat16), y_true)
    assert jnp.abs(loss_bf16 - ref_bf16) < 1e-3, (loss_bf16, ref_bf16)

    # Tail-masked path: S = 578 rows -> 512-row tiles with a masked overhang.
    k4, k5, k6 = jax.random.split(jax.random.PRNGKey(1), 3)
    N2, C2, H2, W2 = 1, 3, 272, 272
    y_pred2 = jax.random.normal(k4, (N2, C2, H2, W2), dtype=jnp.float32)
    y_true2 = jax.random.randint(k5, (N2, H2, W2), 0, C2, dtype=jnp.int32)
    y_true2 = jnp.where(jax.random.bernoulli(k6, 0.1, (N2, H2, W2)),
                        IGNORE_INDEX, y_true2)
    loss2 = jax.block_until_ready(pidnet_loss(y_pred2, y_true2))
    ref2 = _reference_loss(y_pred2, y_true2)
    assert jnp.abs(loss2 - ref2) < 1e-3 * max(1.0, float(jnp.abs(ref2))), \
        (loss2, ref2)

    print("KERNEL_OK")
</pallas_src>

<mosaic_0001>
module attributes {stable_mosaic.version = 11 : i64} {
  func.func @_soft_ce_kernel(%arg0: i32, %arg1: i32, %arg2: memref<1x4x2x128xf32, #tpu.memory_space<vmem>>, %arg3: memref<1x1x2x128xi32, #tpu.memory_space<vmem>>, %arg4: memref<1x1x2x256xf32, #tpu.memory_space<vmem>>) attributes {dimension_semantics = [#tpu.dimension_semantics<parallel>, #tpu.dimension_semantics<parallel>], iteration_bounds = array<i64: 2, 1>, scalar_prefetch = 0 : i64, scratch_operands = 0 : i64, tpu.core_type = #tpu.core_type<tc>, window_params = [{transform_indices = @transform_0, window_bounds = array<i64: 1, 4, 2, 128>}, {transform_indices = @transform_1, window_bounds = array<i64: 1, 1, 2, 128>}, {transform_indices = @transform_2, window_bounds = array<i64: 1, 1, 2, 256>}]} {
    %c0 = arith.constant 0 : index
    %c0_0 = arith.constant 0 : index
    %c0_1 = arith.constant 0 : index
    %c0_2 = arith.constant 0 : index
    %0 = vector.load %arg3[%c0, %c0_0, %c0_1, %c0_2] : memref<1x1x2x128xi32, #tpu.memory_space<vmem>>, vector<1x1x2x128xi32>
    %1 = vector.shape_cast %0 : vector<1x1x2x128xi32> to vector<2x128xi32>
    %c255_i32 = arith.constant 255 : i32
    %2 = vector.broadcast %c255_i32 : i32 to vector<2x128xi32>
    %3 = arith.cmpi ne, %1, %2 : vector<2x128xi32>
    %c0_3 = arith.constant 0 : index
    %c0_4 = arith.constant 0 : index
    %c0_5 = arith.constant 0 : index
    %c0_6 = arith.constant 0 : index
    %4 = vector.load %arg2[%c0_3, %c0_4, %c0_5, %c0_6] : memref<1x4x2x128xf32, #tpu.memory_space<vmem>>, vector<1x1x2x128xf32>
    %5 = vector.shape_cast %4 : vector<1x1x2x128xf32> to vector<2x128xf32>
    %c0_7 = arith.constant 0 : index
    %c1 = arith.constant 1 : index
    %c0_8 = arith.constant 0 : index
    %c0_9 = arith.constant 0 : index
    %6 = vector.load %arg2[%c0_7, %c1, %c0_8, %c0_9] : memref<1x4x2x128xf32, #tpu.memory_space<vmem>>, vector<1x1x2x128xf32>
    %7 = vector.shape_cast %6 : vector<1x1x2x128xf32> to vector<2x128xf32>
    %8 = arith.maximumf %5, %7 : vector<2x128xf32>
    %c0_10 = arith.constant 0 : index
    %c2 = arith.constant 2 : index
    %c0_11 = arith.constant 0 : index
    %c0_12 = arith.constant 0 : index
    %9 = vector.load %arg2[%c0_10, %c2, %c0_11, %c0_12] : memref<1x4x2x128xf32, #tpu.memory_space<vmem>>, vector<1x1x2x128xf32>
    %10 = vector.shape_cast %9 : vector<1x1x2x128xf32> to vector<2x128xf32>
    %11 = arith.maximumf %8, %10 : vector<2x128xf32>
    %c0_13 = arith.constant 0 : index
    %c3 = arith.constant 3 : index
    %c0_14 = arith.constant 0 : index
    %c0_15 = arith.constant 0 : index
    %12 = vector.load %arg2[%c0_13, %c3, %c0_14, %c0_15] : memref<1x4x2x128xf32, #tpu.memory_space<vmem>>, vector<1x1x2x128xf32>
    %13 = vector.shape_cast %12 : vector<1x1x2x128xf32> to vector<2x128xf32>
    %14 = arith.maximumf %11, %13 : vector<2x128xf32>
    %cst = arith.constant 0.000000e+00 : f32
    %15 = vector.broadcast %cst : f32 to vector<2x128xf32>
    %cst_16 = arith.constant 0.000000e+00 : f32
    %16 = vector.broadcast %cst_16 : f32 to vector<2x128xf32>
    %cst_17 = arith.constant 0.000000e+00 : f32
    %17 = vector.broadcast %cst_17 : f32 to vector<2x128xf32>
    %c0_18 = arith.constant 0 : index
    %c0_19 = arith.constant 0 : index
    %c0_20 = arith.constant 0 : index
    %c0_21 = arith.constant 0 : index
    %18 = vector.load %arg2[%c0_18, %c0_19, %c0_20, %c0_21] : memref<1x4x2x128xf32, #tpu.memory_space<vmem>>, vector<1x1x2x128xf32>
    %19 = vector.shape_cast %18 : vector<1x1x2x128xf32> to vector<2x128xf32>
    %20 = arith.subf %19, %14 : vector<2x128xf32>
    %21 = math.exp %20 : vector<2x128xf32>
    %22 = arith.addf %15, %21 : vector<2x128xf32>
    %23 = arith.addf %16, %19 : vector<2x128xf32>
    %c0_i32 = arith.constant 0 : i32
    %24 = vector.broadcast %c0_i32 : i32 to vector<2x128xi32>
    %25 = arith.cmpi eq, %1, %24 : vector<2x128xi32>
    %cst_22 = arith.constant 0.000000e+00 : f32
    %26 = vector.broadcast %cst_22 : f32 to vector<2x128xf32>
    %27 = arith.select %25, %19, %26 : vector<2x128xi1>, vector<2x128xf32>
    %28 = arith.addf %17, %27 : vector<2x128xf32>
    %c0_23 = arith.constant 0 : index
    %c1_24 = arith.constant 1 : index
    %c0_25 = arith.constant 0 : index
    %c0_26 = arith.constant 0 : index
    %29 = vector.load %arg2[%c0_23, %c1_24, %c0_25, %c0_26] : memref<1x4x2x128xf32, #tpu.memory_space<vmem>>, vector<1x1x2x128xf32>
    %30 = vector.shape_cast %29 : vector<1x1x2x128xf32> to vector<2x128xf32>
    %31 = arith.subf %30, %14 : vector<2x128xf32>
    %32 = math.exp %31 : vector<2x128xf32>
    %33 = arith.addf %22, %32 : vector<2x128xf32>
    %34 = arith.addf %23, %30 : vector<2x128xf32>
    %c1_i32 = arith.constant 1 : i32
    %35 = vector.broadcast %c1_i32 : i32 to vector<2x128xi32>
    %36 = arith.cmpi eq, %1, %35 : vector<2x128xi32>
    %cst_27 = arith.constant 0.000000e+00 : f32
    %37 = vector.broadcast %cst_27 : f32 to vector<2x128xf32>
    %38 = arith.select %36, %30, %37 : vector<2x128xi1>, vector<2x128xf32>
    %39 = arith.addf %28, %38 : vector<2x128xf32>
    %c0_28 = arith.constant 0 : index
    %c2_29 = arith.constant 2 : index
    %c0_30 = arith.constant 0 : index
    %c0_31 = arith.constant 0 : index
    %40 = vector.load %arg2[%c0_28, %c2_29, %c0_30, %c0_31] : memref<1x4x2x128xf32, #tpu.memory_space<vmem>>, vector<1x1x2x128xf32>
    %41 = vector.shape_cast %40 : vector<1x1x2x128xf32> to vector<2x128xf32>
    %42 = arith.subf %41, %14 : vector<2x128xf32>
    %43 = math.exp %42 : vector<2x128xf32>
    %44 = arith.addf %33, %43 : vector<2x128xf32>
    %45 = arith.addf %34, %41 : vector<2x128xf32>
    %c2_i32 = arith.constant 2 : i32
    %46 = vector.broadcast %c2_i32 : i32 to vector<2x128xi32>
    %47 = arith.cmpi eq, %1, %46 : vector<2x128xi32>
    %cst_32 = arith.constant 0.000000e+00 : f32
    %48 = vector.broadcast %cst_32 : f32 to vector<2x128xf32>
    %49 = arith.select %47, %41, %48 : vector<2x128xi1>, vector<2x128xf32>
    %50 = arith.addf %39, %49 : vector<2x128xf32>
    %c0_33 = arith.constant 0 : index
    %c3_34 = arith.constant 3 : index
    %c0_35 = arith.constant 0 : index
    %c0_36 = arith.constant 0 : index
    %51 = vector.load %arg2[%c0_33, %c3_34, %c0_35, %c0_36] : memref<1x4x2x128xf32, #tpu.memory_space<vmem>>, vector<1x1x2x128xf32>
    %52 = vector.shape_cast %51 : vector<1x1x2x128xf32> to vector<2x128xf32>
    %53 = arith.subf %52, %14 : vector<2x128xf32>
    %54 = math.exp %53 : vector<2x128xf32>
    %55 = arith.addf %44, %54 : vector<2x128xf32>
    %56 = arith.addf %45, %52 : vector<2x128xf32>
    %c3_i32 = arith.constant 3 : i32
    %57 = vector.broadcast %c3_i32 : i32 to vector<2x128xi32>
    %58 = arith.cmpi eq, %1, %57 : vector<2x128xi32>
    %cst_37 = arith.constant 0.000000e+00 : f32
    %59 = vector.broadcast %cst_37 : f32 to vector<2x128xf32>
    %60 = arith.select %58, %52, %59 : vector<2x128xi1>, vector<2x128xf32>
    %61 = arith.addf %50, %60 : vector<2x128xf32>
    %62 = math.log %55 : vector<2x128xf32>
    %63 = arith.addf %14, %62 : vector<2x128xf32>
    %64 = arith.subf %63, %61 : vector<2x128xf32>
    %cst_38 = arith.constant 0.000000e+00 : f32
    %65 = vector.broadcast %cst_38 : f32 to vector<2x128xf32>
    %66 = arith.select %3, %64, %65 : vector<2x128xi1>, vector<2x128xf32>
    %cst_39 = arith.constant 4.000000e+00 : f32
    %67 = vector.broadcast %cst_39 : f32 to vector<2x128xf32>
    %68 = arith.mulf %67, %63 : vector<2x128xf32>
    %69 = arith.subf %68, %56 : vector<2x128xf32>
    %cst_40 = arith.constant 0.000000e+00 : f32
    %70 = vector.broadcast %cst_40 : f32 to vector<2x128xf32>
    %71 = arith.select %3, %69, %70 : vector<2x128xi1>, vector<2x128xf32>
    %72 = vector.shape_cast %66 : vector<2x128xf32> to vector<1x2x128xf32>
    %cst_41 = arith.constant dense<0.000000e+00> : vector<2x128xf32>
    %73 = vector.multi_reduction <add>, %72, %cst_41 [0] : vector<1x2x128xf32> to vector<2x128xf32>
    %74 = vector.shape_cast %71 : vector<2x128xf32> to vector<1x2x128xf32>
    %cst_42 = arith.constant dense<0.000000e+00> : vector<2x128xf32>
    %75 = vector.multi_reduction <add>, %74, %cst_42 [0] : vector<1x2x128xf32> to vector<2x128xf32>
    %c0_43 = arith.constant 0 : index
    %c0_44 = arith.constant 0 : index
    %c0_45 = arith.constant 0 : index
    %c0_46 = arith.constant 0 : index
    %76 = vector.load %arg4[%c0_43, %c0_44, %c0_45, %c0_46] : memref<1x1x2x256xf32, #tpu.memory_space<vmem>>, vector<1x1x2x128xf32>
    %77 = vector.shape_cast %76 : vector<1x1x2x128xf32> to vector<2x128xf32>
    %78 = vector.shape_cast %73 : vector<2x128xf32> to vector<1x1x2x128xf32>
    tpu.vector_store %arg4[%c0_43, %c0_44, %c0_45, %c0_46], %78 {strides = array<i32>} : memref<1x1x2x256xf32, #tpu.memory_space<vmem>>, vector<1x1x2x128xf32>,
    %c0_47 = arith.constant 0 : index
    %c0_48 = arith.constant 0 : index
    %c0_49 = arith.constant 0 : index
    %c128 = arith.constant 128 : index
    %79 = vector.load %arg4[%c0_47, %c0_48, %c0_49, %c128] : memref<1x1x2x256xf32, #tpu.memory_space<vmem>>, vector<1x1x2x128xf32>
    %80 = vector.shape_cast %79 : vector<1x1x2x128xf32> to vector<2x128xf32>
    %81 = vector.shape_cast %75 : vector<2x128xf32> to vector<1x1x2x128xf32>
    tpu.vector_store %arg4[%c0_47, %c0_48, %c0_49, %c128], %81 {strides = array<i32>} : memref<1x1x2x256xf32, #tpu.memory_space<vmem>>, vector<1x1x2x128xf32>,
    return
  }
  func.func @transform_0(%arg0: i32, %arg1: i32) -> (i32, i32, i32, i32) {
    %c0_i32 = arith.constant 0 : i32
    %c0_i32_0 = arith.constant 0 : i32
    %c0_i32_1 = arith.constant 0 : i32
    return %arg0, %c0_i32, %arg1, %c0_i32_0 : i32, i32, i32, i32
  }
  func.func @transform_1(%arg0: i32, %arg1: i32) -> (i32, i32, i32, i32) {
    %c0_i32 = arith.constant 0 : i32
    %c0_i32_0 = arith.constant 0 : i32
    %c0_i32_1 = arith.constant 0 : i32
    return %arg0, %c0_i32, %arg1, %c0_i32_0 : i32, i32, i32, i32
  }
  func.func @transform_2(%arg0: i32, %arg1: i32) -> (i32, i32, i32, i32) {
    %c0_i32 = arith.constant 0 : i32
    %c0_i32_0 = arith.constant 0 : i32
    %c0_i32_1 = arith.constant 0 : i32
    return %arg0, %arg1, %c0_i32, %c0_i32_0 : i32, i32, i32, i32
  }
}

</mosaic_0001>

<llo_original>
// kernel: tpu_custom_call.1
$region0: #{tpu_custom_call.1}
  #allocation0 [shape = 'u32[]', space=smem, size = 0x4, offset = 0x4, fixed_abs, tag = 'smem constant byte address 0x4 - core index']
  #allocation1 [shape = 'u32[72,128]{1,0:T(1,128)}', space=vmem, size = 0x9000, scoped, tag = 'internal scratch']
  %s0 = inlined_call_operand.hbm [shape: f32[2,4,2,128], index: 0, kind: input, shape index: {}]
  %s1 = inlined_call_operand.hbm [shape: s32[2,1,2,128], index: 1, kind: input, shape index: {}]
  %s2 = inlined_call_operand.hbm [shape: f32[2,1,2,256], index: 2, kind: output, shape index: {}]
  %s3 = sld [smem:[#allocation0]]
  $region49: #{tpu_custom_call.1} parent=0
    _
  %s5 = ssub.s32 1, %s3
  %s6 = scalar_select 0, %s5, %s3
  $region1: #{tpu_custom_call.1} parent=0
    #allocation2 [shape = 'u8[8192]{0}', space=vmem, size = 0x2000, scoped, tag = 'input window, operand 0']
    #allocation3 [shape = 's32[2]{0}', space=sflag, size = 0x8, scoped, tag = 'scoped memory for tpu_custom_call.1']
    #allocation4 [shape = 's32[2]{0}', space=sflag, size = 0x8, scoped, tag = 'scoped memory for tpu_custom_call.1']
    #allocation5 [shape = 'u8[2048]{0}', space=vmem, size = 0x800, scoped, tag = 'input window, operand 1']
    #allocation6 [shape = 's32[2]{0}', space=sflag, size = 0x8, scoped, tag = 'scoped memory for tpu_custom_call.1']
    #allocation7 [shape = 'u8[4096]{0}', space=vmem, size = 0x1000, scoped, tag = 'output window, operand 0']
    %7 = vsyncpa [#allocation3], 0
    %s8 = scalar_lea.sflag [#allocation3], 1
    %9 = vsyncpa %s8, 0
    %10 = vsyncpa [#allocation6], 0
    %s11 = scalar_lea.sflag [#allocation6], 1
    %12 = vsyncpa %s11, 0
    %13 = vsyncpa [#allocation4], 0
    %s14 = scalar_lea.sflag [#allocation4], 1
    %15 = vsyncpa %s14, 0
    loop: start=0, step=1, limit=4
    $region2: #{tpu_custom_call.1} parent=1 // loop_pre_header
      _
    $region3: #{tpu_custom_call.1} parent=1 // loop_header
      %s17 = sphi 0, %s21
      %p18 = scmp.ge.s32.totalorder %s17, 4
      %s24 = sphi 0, %s36
      %s25 = sphi 0, %s32
      %s26 = sphi 0, %s24
      %s27 = sphi 0, %s25
      %s28 = sphi 0, %s26
      %s29 = sphi 0, %s27
      %s41 = sphi 0, %s43
      %s44 = sphi 0, %s41
      %s45 = sphi 0, %s44
      %s61 = sphi 0, %s45
      %s69 = sphi 0, %s71
      %s72 = sphi 0, %s69
      %s73 = sphi 0, %s72
      %s89 = sphi 0, %s73
      %s97 = sphi 0, %s99
      %s100 = sphi 0, %s97
      %s101 = sphi 0, %s100
      %s117 = sphi 0, %s101
    $region4: #{tpu_custom_call.1} parent=1 // loop_header_branch
      %20 = sbr.rel (%p18) target = $region8
    $region5: #{tpu_custom_call.1} parent=1 // loop_body
      %s22 = ssub.s32 %s17, 1
      %s23 = ssub.s32 %s17, 2
      %s30 = sadd.s32 1, %s25
      %p31 = scmp.ge.s32.totalorder %s30, 1
      %s32 = scalar_select %p31, 0, %s30
      %s33 = sadd.s32 1, %s24
      %s34 = scalar_select %p31, %s33, %s24
      %p35 = scmp.ge.s32.totalorder %s34, 2
      %s36 = scalar_select %p35, 0, %s34
      %s37 = ssub.s32 %s24, %s36
      %s38 = ssub.s32 %s25, %s32
      %s39 = sor.u32 %s37, %s38
      %p40 = scmp.eq.s32.totalorder %s39, 0
      %s42 = sadd.s32 %s41, 1
      %s43 = scalar_select %p40, %s41, %s42
      %p46 = pneg %p40
      %p47 = scmp.eq.s32.totalorder %s17, 1
      %p48 = por %p46, %p47
      %p49 = scmp.ne.s32.totalorder %s41, %s44
      %p50 = scmp.eq.s32.totalorder %s17, 0
      %p51 = por %p49, %p50
      %p52 = scmp.ne.s32.totalorder %s41, %s44
      %p53 = scmp.eq.s32.totalorder %s22, 1
      %p54 = por %p52, %p53
      %p55 = scmp.ne.s32.totalorder %s44, %s45
      %p56 = scmp.eq.s32.totalorder %s22, 0
      %p57 = por %p55, %p56
      %p58 = scmp.ne.s32.totalorder %s44, %s45
      %p59 = scmp.eq.s32.totalorder %s23, 1
      %p60 = por %p58, %p59
      %p62 = scmp.ne.s32.totalorder %s45, %s61
      %p63 = scmp.eq.s32.totalorder %s23, 0
      %p64 = por %p62, %p63
      %s65 = ssub.s32 %s24, %s36
      %s66 = ssub.s32 %s25, %s32
      %s67 = sor.u32 %s65, %s66
      %p68 = scmp.eq.s32.totalorder %s67, 0
      %s70 = sadd.s32 %s69, 1
      %s71 = scalar_select %p68, %s69, %s70
      %p74 = pneg %p68
      %p75 = scmp.eq.s32.totalorder %s17, 1
      %p76 = por %p74, %p75
      %p77 = scmp.ne.s32.totalorder %s69, %s72
      %p78 = scmp.eq.s32.totalorder %s17, 0
      %p79 = por %p77, %p78
      %p80 = scmp.ne.s32.totalorder %s69, %s72
      %p81 = scmp.eq.s32.totalorder %s22, 1
      %p82 = por %p80, %p81
      %p83 = scmp.ne.s32.totalorder %s72, %s73
      %p84 = scmp.eq.s32.totalorder %s22, 0
      %p85 = por %p83, %p84
      %p86 = scmp.ne.s32.totalorder %s72, %s73
      %p87 = scmp.eq.s32.totalorder %s23, 1
      %p88 = por %p86, %p87
      %p90 = scmp.ne.s32.totalorder %s73, %s89
      %p91 = scmp.eq.s32.totalorder %s23, 0
      %p92 = por %p90, %p91
      %s93 = ssub.s32 %s24, %s36
      %s94 = ssub.s32 %s25, %s32
      %s95 = sor.u32 %s93, %s94
      %p96 = scmp.eq.s32.totalorder %s95, 0
      %s98 = sadd.s32 %s97, 1
      %s99 = scalar_select %p96, %s97, %s98
      %p102 = pneg %p96
      %p103 = scmp.eq.s32.totalorder %s17, 1
      %p104 = por %p102, %p103
      %p105 = scmp.ne.s32.totalorder %s97, %s100
      %p106 = scmp.eq.s32.totalorder %s17, 0
      %p107 = por %p105, %p106
      %p108 = scmp.ne.s32.totalorder %s97, %s100
      %p109 = scmp.eq.s32.totalorder %s22, 1
      %p110 = por %p108, %p109
      %p111 = scmp.ne.s32.totalorder %s100, %s101
      %p112 = scmp.eq.s32.totalorder %s22, 0
      %p113 = por %p111, %p112
      %p114 = scmp.ne.s32.totalorder %s100, %s101
      %p115 = scmp.eq.s32.totalorder %s23, 1
      %p116 = por %p114, %p115
      %p118 = scmp.ne.s32.totalorder %s101, %s117
      %p119 = scmp.eq.s32.totalorder %s23, 0
      %p120 = por %p118, %p119
      %p121 = scmp.le.s32.totalorder 1, %s17
      %p122 = scmp.lt.s32.totalorder %s17, 3
      %p123 = pnand %p121, %p122
      %p124 = pneg %p123
      // Predicated region
      $region9: #{tpu_custom_call.1} parent=5 // pred_check
        _
      $region10: #{tpu_custom_call.1} parent=5 // pred_check_branch
        %126 = sbr.rel (%p123) target = $region12
      $region11: #{tpu_custom_call.1} parent=5 // pred_region
        %s127 = ssub.s32 %s17, 1
      $region12: #{tpu_custom_call.1} parent=5 // pred_fallthru
        _
      %p128 = scmp.lt.s32.totalorder %s17, 2
      // Predicated region
      $region13: #{tpu_custom_call.1} parent=5 // pred_check
        %p129 = pneg %p128
      $region14: #{tpu_custom_call.1} parent=5 // pred_check_branch
        %131 = sbr.rel (%p129) target = $region16
      $region15: #{tpu_custom_call.1} parent=5 // pred_region
        // Predicated region
        $region17: #{tpu_custom_call.1} parent=15 // pred_check
          %p132 = pneg %p51
        $region18: #{tpu_custom_call.1} parent=15 // pred_check_branch
          %134 = sbr.rel (%p132) target = $region20
        $region19: #{tpu_custom_call.1} parent=15 // pred_region
          %s135 = sand.u32 %s41, 1
          %s136 = scalar_lea.sflag [#allocation3], %s135
          %s137 = sand.u32 %s41, 1
          %s138 = smul.addr %s137, 8
          %s139 = scalar_lea.vmem [#allocation2], %s138
          %141 = vsyncadd %s136, 0
          %s142 = smul.addr %s24, 4
          %s143 = sadd.s32 %s25, %s142
          %s144 = smul.addr %s143, 2
          %s145 = scalar_lea.hbm %s0, %s144
          %s146 = sshll.u32 %s145, 4
          %s147 = int_to_ptr.hbm [resolvable:$true] %s146
          %s148 = sshll.u32 %s139, 4
          %s149 = int_to_ptr.vmem [resolvable:$true] %s148
          %154 = dma.hbm_to_vmem [thread:$0]  %s147, 128, %s149, %s136, 32, 32, 2
        $region20: #{tpu_custom_call.1} parent=15 // pred_fallthru
          _
        // Predicated region
        $region21: #{tpu_custom_call.1} parent=15 // pred_check
          %p155 = pneg %p79
        $region22: #{tpu_custom_call.1} parent=15 // pred_check_branch
          %157 = sbr.rel (%p155) target = $region24
        $region23: #{tpu_custom_call.1} parent=15 // pred_region
          %s158 = sand.u32 %s69, 1
          %s159 = scalar_lea.sflag [#allocation6], %s158
          %s160 = sand.u32 %s69, 1
          %s161 = smul.addr %s160, 2
          %s162 = scalar_lea.vmem [#allocation5], %s161
          %164 = vsyncadd %s159, 0
          %s165 = sadd.s32 %s25, %s24
          %s166 = smul.addr %s165, 2
          %s167 = scalar_lea.hbm %s1, %s166
          %s169 = sshll.u32 %s167, 4
          %s170 = int_to_ptr.hbm [resolvable:$true] %s169
          %s171 = sshll.u32 %s162, 4
          %s172 = int_to_ptr.vmem [resolvable:$true] %s171
          %174 = dma.hbm_to_vmem [thread:$0]  %s170, 32, %s172, %s159
        $region24: #{tpu_custom_call.1} parent=15 // pred_fallthru
          _
      $region16: #{tpu_custom_call.1} parent=5 // pred_fallthru
        _
      %p175 = scmp.le.s32.totalorder 1, %s17
      %p176 = scmp.lt.s32.totalorder %s17, 3
      %p177 = pnand %p175, %p176
      %p178 = pneg %p177
      // Predicated region
      $region25: #{tpu_custom_call.1} parent=5 // pred_check
        _
      $region26: #{tpu_custom_call.1} parent=5 // pred_check_branch
        %180 = sbr.rel (%p177) target = $region28
      $region27: #{tpu_custom_call.1} parent=5 // pred_region
        %s181 = ssub.s32 %s17, 1
        %s182 = sand.u32 %s44, 1
        %s183 = scalar_lea.sflag [#allocation3], %s182
        %s184 = sand.u32 %s44, 1
        %s185 = smul.addr %s184, 8
        %s186 = scalar_lea.vmem [#allocation2], %s185
        // Predicated region
        $region29: #{tpu_custom_call.1} parent=27 // pred_check
          %p187 = pneg %p57
        $region30: #{tpu_custom_call.1} parent=27 // pred_check_branch
          %189 = sbr.rel (%p187) target = $region32
        $region31: #{tpu_custom_call.1} parent=27 // pred_region
          %191 = dma.done %s183, 128
        $region32: #{tpu_custom_call.1} parent=27 // pred_fallthru
          _
        %s192 = sand.u32 %s72, 1
        %s193 = scalar_lea.sflag [#allocation6], %s192
        %s194 = sand.u32 %s72, 1
        %s195 = smul.addr %s194, 2
        %s196 = scalar_lea.vmem [#allocation5], %s195
        // Predicated region
        $region33: #{tpu_custom_call.1} parent=27 // pred_check
          %p197 = pneg %p85
        $region34: #{tpu_custom_call.1} parent=27 // pred_check_branch
          %199 = sbr.rel (%p197) target = $region36
        $region35: #{tpu_custom_call.1} parent=27 // pred_region
          %201 = dma.done %s193, 32
        $region36: #{tpu_custom_call.1} parent=27 // pred_fallthru
          _
        %s202 = sand.u32 %s44, 1
        %s203 = scalar_lea.sflag [#allocation3], %s202
        %s204 = sand.u32 %s44, 1
        %s205 = smul.addr %s204, 8
        %s206 = scalar_lea.vmem [#allocation2], %s205
        %p207 = pneg %p57
        %p208 = pneg %p54
        %s209 = sand.u32 %s72, 1
        %s210 = scalar_lea.sflag [#allocation6], %s209
        %s211 = sand.u32 %s72, 1
        %s212 = smul.addr %s211, 2
        %s213 = scalar_lea.vmem [#allocation5], %s212
        %p214 = pneg %p85
        %p215 = pneg %p82
        %p216 = pneg %p113
        %p217 = pneg %p110
        %s218 = sand.u32 %s100, 1
        %s219 = scalar_lea.sflag [#allocation4], %s218
        %s220 = sand.u32 %s100, 1
        %s221 = smul.addr %s220, 4
        %s222 = scalar_lea.vmem [#allocation7], %s221
        %v223 = vld [vmem:[%s196] sm:$0x3]
        %vm224 = vcmp.ne.s32.totalorder %v223, 255
        %v225 = vld [vmem:[%s186] sm:$0x3]
        %s226 = scalar_lea.vmem %s186, 2 [#allocation2]
        %v227 = vld [vmem:[%s226] sm:$0x3]
        %v228 = vmax.f32 %v225, %v227
        %s229 = scalar_lea.vmem %s186, 4 [#allocation2]
        %v230 = vld [vmem:[%s229] sm:$0x3]
        %v231 = vmax.f32 %v228, %v230
        %s232 = scalar_lea.vmem %s186, 6 [#allocation2]
        %v233 = vld [vmem:[%s232] sm:$0x3]
        %v234 = vmax.f32 %v231, %v233
        %v235 = vsub.f32 %v225, %v234
        %v236 = vmul.f32 %v235, 1.442695
        %v237 = vpow.pop %v236
        %v238 = vadd.f32 %v237, 0.0
        %v239 = vadd.f32 %v225, 0.0
        %vm240 = vcmp.eq.s32.totalorder %v223, 0
        %v241 = vsel %vm240, %v225, 0.0
        %v242 = vadd.f32 %v241, 0.0
        %v243 = vsub.f32 %v227, %v234
        %v244 = vmul.f32 %v243, 1.442695
        %v245 = vpow.pop %v244
        %v246 = vadd.f32 %v238, %v245
        %v247 = vadd.f32 %v239, %v227
        %vm248 = vcmp.eq.s32.totalorder %v223, 1
        %v249 = vsel %vm248, %v227, 0.0
        %v250 = vadd.f32 %v242, %v249
        %v251 = vsub.f32 %v230, %v234
        %v252 = vmul.f32 %v251, 1.442695
        %v253 = vpow.pop %v252
        %v254 = vadd.f32 %v246, %v253
        %v255 = vadd.f32 %v247, %v230
        %vm256 = vcmp.eq.s32.totalorder %v223, 2
        %v257 = vsel %vm256, %v230, 0.0
        %v258 = vadd.f32 %v250, %v257
        %v259 = vsub.f32 %v233, %v234
        %v260 = vmul.f32 %v259, 1.442695
        %v261 = vpow.pop %v260
        %v262 = vadd.f32 %v254, %v261
        %v263 = vadd.f32 %v255, %v233
        %vm264 = vcmp.eq.s32.totalorder %v223, 3
        %v265 = vsel %vm264, %v233, 0.0
        %v266 = vadd.f32 %v258, %v265
        %v267 = vlog2.pop %v262
        %v268 = vmul.f32 %v267, 0.6931472
        %v269 = vadd.f32 %v234, %v268
        %v270 = vsub.f32 %v269, %v266
        %v271 = vsel %vm224, %v270, 0.0
        %v272 = vmul.f32 %v269, 4.0
        %v273 = vsub.f32 %v272, %v263
        %v274 = vsel %vm224, %v273, 0.0
        %v275 = vadd.f32 %v271, 0.0
        %v276 = vadd.f32 %v274, 0.0
        %277 = vst [vmem:[%s222] sm:$0x3] %v275
        %278 = vst [vmem:[%s222 + $0x2] sm:$0x3] %v276
        %s279 = sand.u32 %s100, 1
        %s280 = scalar_lea.sflag [#allocation4], %s279
        %s281 = sand.u32 %s100, 1
        %s282 = smul.addr %s281, 4
        %s283 = scalar_lea.vmem [#allocation7], %s282
        // Predicated region
        $region37: #{tpu_custom_call.1} parent=27 // pred_check
          %p284 = pneg %p110
        $region38: #{tpu_custom_call.1} parent=27 // pred_check_branch
          %286 = sbr.rel (%p284) target = $region40
        $region39: #{tpu_custom_call.1} parent=27 // pred_region
          %288 = vsyncadd %s280, 0
          %s289 = smul.addr %s27, 2
          %s290 = smul.addr %s26, 2
          %s291 = sadd.s32 %s289, %s290
          %s292 = smul.addr %s291, 2
          %s293 = scalar_lea.hbm %s2, %s292
          %s295 = sshll.u32 %s283, 4
          %s296 = int_to_ptr.vmem [resolvable:$true] %s295
          %s297 = sshll.u32 %s293, 4
          %s298 = int_to_ptr.hbm [resolvable:$true] %s297
          %300 = dma.vmem_to_hbm [thread:$0]  %s296, 64, %s298, %s280
        $region40: #{tpu_custom_call.1} parent=27 // pred_fallthru
          _
      $region28: #{tpu_custom_call.1} parent=5 // pred_fallthru
        _
      %p301 = scmp.le.s32.totalorder 2, %s17
      // Predicated region
      $region41: #{tpu_custom_call.1} parent=5 // pred_check
        %p302 = pneg %p301
      $region42: #{tpu_custom_call.1} parent=5 // pred_check_branch
        %304 = sbr.rel (%p302) target = $region44
      $region43: #{tpu_custom_call.1} parent=5 // pred_region
        %s305 = ssub.s32 %s17, 2
        // Predicated region
        $region45: #{tpu_custom_call.1} parent=43 // pred_check
          %p306 = pneg %p116
        $region46: #{tpu_custom_call.1} parent=43 // pred_check_branch
          %308 = sbr.rel (%p306) target = $region48
        $region47: #{tpu_custom_call.1} parent=43 // pred_region
          %s309 = sand.u32 %s101, 1
          %s310 = scalar_lea.sflag [#allocation4], %s309
          %s311 = sand.u32 %s101, 1
          %s312 = smul.addr %s311, 4
          %s313 = scalar_lea.vmem [#allocation7], %s312
          %315 = dma.done %s310, 64
        $region48: #{tpu_custom_call.1} parent=43 // pred_fallthru
          _
      $region44: #{tpu_custom_call.1} parent=5 // pred_fallthru
        _
    $region6: #{tpu_custom_call.1} parent=1 // loop_footer
      %s21 = sadd.s32 1, %s17
    $region7: #{tpu_custom_call.1} parent=1 // loop_footer_branch
      %16 = sbr.rel target = $region3
    $region8: #{tpu_custom_call.1} parent=1 // loop_exit
      _
    %316 = vsyncpa [#allocation3], 1
    %s317 = scalar_lea.sflag [#allocation3], 1
    %318 = vsyncpa %s317, 1
    %319 = vsyncpa [#allocation6], 1
    %s320 = scalar_lea.sflag [#allocation6], 1
    %321 = vsyncpa %s320, 1
    %322 = vsyncpa [#allocation4], 1
    %s323 = scalar_lea.sflag [#allocation4], 1
    %324 = vsyncpa %s323, 1

</llo_original>
